<compile_context>
chip_gen: v7x
topology: tpu7x:2x2x1
jax: 0.10.0
libtpu: 0.0.40
codegen_flags: <defaults>
</compile_context>

<pallas_src>
import jax
import jax.numpy as jnp
from jax.experimental import pallas as pl
from jax.experimental.pallas import tpu as pltpu


def headnet_kernel(x_ref, w_ref, b_ref, o_ref):
    # One batch tile per grid step: (tm, K) @ (K, N) on the MXU with f32
    # accumulation, bias broadcast-add in f32, cast to output dtype on store.
    acc = jnp.dot(x_ref[...], w_ref[...], preferred_element_type=jnp.float32)
    o_ref[...] = (acc + b_ref[...].astype(jnp.float32)).astype(o_ref.dtype)


def _round_up(n, m):
    return ((n + m - 1) // m) * m


def headnet_forward(x, w, b, *, max_block_b=8192, min_grid_steps=4):
    """Forward pass of HeadNet.

    x: (B, input_size), w: (input_size, n_actions) [PyTorch weight transposed],
    b: (1, n_actions). Returns (B, n_actions) in x.dtype.
    """
    B, K = x.shape
    Kw, N = w.shape
    assert K == Kw and b.shape == (1, N)
    out_dtype = x.dtype

    # --- Batch-tile selection -------------------------------------------------
    # Sublane-aligned (multiple of 8). Keep at least `min_grid_steps` grid steps
    # when B is large (pipelining + dual-TC sharding on v7x), cap the tile so
    # VMEM stays comfortable on every generation, and never exceed round_up(B).
    target_tm = _round_up(pl.cdiv(B, min_grid_steps), 8)
    tm = max(8, min(_round_up(max_block_b, 8), target_tm, _round_up(B, 8)))
    grid = (pl.cdiv(B, tm),)

    # --- VMEM budget (with 128-lane padding) ----------------------------------
    itemsize_x = jnp.dtype(x.dtype).itemsize
    itemsize_o = jnp.dtype(out_dtype).itemsize
    x_row_bytes = _round_up(K, 128) * itemsize_x      # (tm, 60) -> tm * 512 B (f32)
    o_row_bytes = _round_up(N, 128) * itemsize_o      # (tm, 4)  -> tm * 512 B (f32)
    w_bytes = _round_up(K, 8) * _round_up(N, 128) * jnp.dtype(w.dtype).itemsize
    b_bytes = 8 * _round_up(N, 128) * jnp.dtype(b.dtype).itemsize
    vmem_bytes = 2 * tm * (x_row_bytes + o_row_bytes) + 2 * (w_bytes + b_bytes)
    vmem_limit = int(min(vmem_bytes + (4 << 20), 48 << 20))  # < v7x 64 MiB phys

    # --- Cost estimate (advisory) ---------------------------------------------
    cost = pl.CostEstimate(
        flops=2 * B * K * N,
        transcendentals=0,
        bytes_accessed=B * K * itemsize_x
        + K * N * jnp.dtype(w.dtype).itemsize
        + N * jnp.dtype(b.dtype).itemsize
        + B * N * itemsize_o,
    )

    return pl.pallas_call(
        headnet_kernel,
        out_shape=jax.ShapeDtypeStruct((B, N), out_dtype),
        grid=grid,
        in_specs=[
            pl.BlockSpec((tm, K), lambda i: (i, 0)),   # x streamed over batch
            pl.BlockSpec((K, N), lambda i: (0, 0)),    # W resident in VMEM
            pl.BlockSpec((1, N), lambda i: (0, 0)),    # bias resident in VMEM
        ],
        out_specs=pl.BlockSpec((tm, N), lambda i: (i, 0)),
        compiler_params=pltpu.CompilerParams(
            dimension_semantics=("parallel",),
            vmem_limit_bytes=vmem_limit,
        ),
        cost_estimate=cost,
    )(x, w, b)


def init_headnet_params(key, input_size=60, n_actions=4):
    # PyTorch nn.Linear default init: U(-1/sqrt(in), 1/sqrt(in)) for W and b.
    # Weight stored as (input_size, n_actions) (transposed PyTorch layout) so
    # the kernel computes x @ W directly.
    kw, kb = jax.random.split(key)
    bound = 1.0 / jnp.sqrt(jnp.float32(input_size))
    w = jax.random.uniform(kw, (input_size, n_actions), jnp.float32, -bound, bound)
    b = jax.random.uniform(kb, (1, n_actions), jnp.float32, -bound, bound)
    return w, b


if __name__ == "__main__":
    key = jax.random.PRNGKey(0)
    k_in, k_params = jax.random.split(key)

    batch = 2
    input_size = 60
    n_actions = 4

    x = jax.random.normal(k_in, (batch, input_size), jnp.float32)
    w, b = init_headnet_params(k_params, input_size, n_actions)

    # Tiny batch: single 8-row tile, B=2 < tm=8 exercises the masked-write path.
    out = jax.block_until_ready(headnet_forward(x, w, b))
    ref = x @ w + b
    assert out.shape == (batch, n_actions)
    assert jnp.allclose(out, ref, atol=1e-5, rtol=1e-5)

    # Larger batch, B % tm != 0: tiled path with a ragged (masked) last tile
    # and no wrapper-side padding / slicing.
    B2 = 2000
    x2 = jax.random.normal(jax.random.PRNGKey(1), (B2, input_size), jnp.float32)
    out2 = jax.block_until_ready(headnet_forward(x2, w, b))
    ref2 = x2 @ w + b
    assert out2.shape == (B2, n_actions)
    assert jnp.allclose(out2, ref2, atol=1e-4, rtol=1e-4)

    # Explicit small-tile ragged check (tm cap forces multiple tiles).
    out3 = jax.block_until_ready(headnet_forward(x2, w, b, max_block_b=96))
    assert jnp.allclose(out3, ref2, atol=1e-4, rtol=1e-4)

    print("KERNEL_OK")
</pallas_src>

<mosaic_0001>
module attributes {stable_mosaic.version = 11 : i64} {
  func.func @headnet_kernel(%arg0: i32, %arg1: memref<8x60xf32, #tpu.memory_space<vmem>>, %arg2: memref<60x4xf32, #tpu.memory_space<vmem>>, %arg3: memref<1x4xf32, #tpu.memory_space<vmem>>, %arg4: memref<8x4xf32, #tpu.memory_space<vmem>>) attributes {dimension_semantics = [#tpu.dimension_semantics<parallel>], iteration_bounds = array<i64: 1>, scalar_prefetch = 0 : i64, scratch_operands = 0 : i64, tpu.core_type = #tpu.core_type<tc>, window_params = [{transform_indices = @transform_0, window_bounds = array<i64: 8, 60>}, {pipeline_mode = #tpu.pipeline_mode<synchronous>, transform_indices = @transform_1, window_bounds = array<i64: 60, 4>}, {pipeline_mode = #tpu.pipeline_mode<synchronous>, transform_indices = @transform_2, window_bounds = array<i64: 1, 4>}, {transform_indices = @transform_3, window_bounds = array<i64: 8, 4>}]} {
    %c0 = arith.constant 0 : index
    %c0_0 = arith.constant 0 : index
    %0 = vector.load %arg1[%c0, %c0_0] : memref<8x60xf32, #tpu.memory_space<vmem>>, vector<8x60xf32>
    %c0_1 = arith.constant 0 : index
    %c0_2 = arith.constant 0 : index
    %1 = vector.load %arg2[%c0_1, %c0_2] : memref<60x4xf32, #tpu.memory_space<vmem>>, vector<60x4xf32>
    %cst = arith.constant dense<0.000000e+00> : vector<8x4xf32>
    %2 = tpu.matmul %0, %1, %cst {dimension_numbers = #tpu.dot_dimension_numbers<[1], [0], [0], [1], [0, 0, 1, 1], [], []>} : vector<8x60xf32>, vector<60x4xf32>, vector<8x4xf32> -> vector<8x4xf32>
    %c0_3 = arith.constant 0 : index
    %c0_4 = arith.constant 0 : index
    %3 = vector.load %arg3[%c0_3, %c0_4] : memref<1x4xf32, #tpu.memory_space<vmem>>, vector<1x4xf32>
    %4 = vector.broadcast %3 : vector<1x4xf32> to vector<8x4xf32>
    %5 = arith.addf %2, %4 : vector<8x4xf32>
    %c0_5 = arith.constant 0 : index
    %c0_6 = arith.constant 0 : index
    %6 = vector.load %arg4[%c0_5, %c0_6] : memref<8x4xf32, #tpu.memory_space<vmem>>, vector<8x4xf32>
    tpu.vector_store %arg4[%c0_5, %c0_6], %5 {strides = array<i32>} : memref<8x4xf32, #tpu.memory_space<vmem>>, vector<8x4xf32>,
    return
  }
  func.func @transform_0(%arg0: i32) -> (i32, i32) {
    %c0_i32 = arith.constant 0 : i32
    %c0_i32_0 = arith.constant 0 : i32
    return %arg0, %c0_i32 : i32, i32
  }
  func.func @transform_1(%arg0: i32) -> (i32, i32) {
    %c0_i32 = arith.constant 0 : i32
    %c0_i32_0 = arith.constant 0 : i32
    %c0_i32_1 = arith.constant 0 : i32
    return %c0_i32, %c0_i32_0 : i32, i32
  }
  func.func @transform_2(%arg0: i32) -> (i32, i32) {
    %c0_i32 = arith.constant 0 : i32
    %c0_i32_0 = arith.constant 0 : i32
    %c0_i32_1 = arith.constant 0 : i32
    return %c0_i32, %c0_i32_0 : i32, i32
  }
  func.func @transform_3(%arg0: i32) -> (i32, i32) {
    %c0_i32 = arith.constant 0 : i32
    %c0_i32_0 = arith.constant 0 : i32
    return %arg0, %c0_i32 : i32, i32
  }
}

</mosaic_0001>

<llo_original>
// kernel: tpu_custom_call.1
$region0: #{tpu_custom_call.1}
  #allocation0 [shape = 'u32[]', space=smem, size = 0x4, offset = 0x4, fixed_abs, tag = 'smem constant byte address 0x4 - core index']
  #allocation1 [shape = 'u32[144,128]{1,0:T(1,128)}', space=vmem, size = 0x12000, scoped, tag = 'internal scratch']
  %s0 = inlined_call_operand.vmem [shape: f32[2,60], index: 0, kind: input, shape index: {}]
  %s1 = inlined_call_operand.vmem [shape: f32[60,4], index: 1, kind: input, shape index: {}]
  %s2 = inlined_call_operand.vmem [shape: f32[1,4], index: 2, kind: input, shape index: {}]
  %s3 = inlined_call_operand.hbm [shape: f32[2,4], index: 3, kind: output, shape index: {}]
  %s4 = sld [smem:[#allocation0]]
  $region22: #{tpu_custom_call.1} parent=0
    _
  %s6 = ssub.s32 1, %s4
  %s7 = scalar_select 0, %s6, %s4
  $region1: #{tpu_custom_call.1} parent=0
    #allocation2 [shape = 'u8[4096]{0}', space=vmem, size = 0x1000, scoped, tag = 'output window, operand 0, single buffered']
    #allocation3 [shape = 's32[1]{0}', space=sflag, size = 0x4, scoped, tag = 'scoped memory for tpu_custom_call.1']
    %8 = vsyncpa [#allocation3], 0
    // Predicated region
    $region2: #{tpu_custom_call.1} parent=1 // pred_check
      _
    $region3: #{tpu_custom_call.1} parent=1 // pred_check_branch
      %10 = sbr.rel (0) target = $region5
    $region4: #{tpu_custom_call.1} parent=1 // pred_region
      _
    $region5: #{tpu_custom_call.1} parent=1 // pred_fallthru
      _
    // Predicated region
    $region6: #{tpu_custom_call.1} parent=1 // pred_check
      _
    $region7: #{tpu_custom_call.1} parent=1 // pred_check_branch
      %12 = sbr.rel (0) target = $region9
    $region8: #{tpu_custom_call.1} parent=1 // pred_region
      _
    $region9: #{tpu_custom_call.1} parent=1 // pred_fallthru
      _
    // Predicated region
    $region10: #{tpu_custom_call.1} parent=1 // pred_check
      _
    $region11: #{tpu_custom_call.1} parent=1 // pred_check_branch
      %14 = sbr.rel (0) target = $region13
    $region12: #{tpu_custom_call.1} parent=1 // pred_region
      _
    $region13: #{tpu_custom_call.1} parent=1 // pred_fallthru
      _
    %v15 = vld [vmem:[%s0] sm:$0xff]
    %v16 = vld [vmem:[%s1] sm:$0xff]
    %v17 = vld [vmem:[%s1 + $0x8] sm:$0xff]
    %v18 = vld [vmem:[%s1 + $0x10] sm:$0xff]
    %v19 = vld [vmem:[%s1 + $0x18] sm:$0xff]
    %v20 = vld [vmem:[%s1 + $0x20] sm:$0xff]
    %v21 = vld [vmem:[%s1 + $0x28] sm:$0xff]
    %v22 = vld [vmem:[%s1 + $0x30] sm:$0xff]
    %v23 = vld [vmem:[%s1 + $0x38] sm:$0xf]
    %v24 = vld [vmem:[%s2] sm:$0x1]
    %v26 = vlaneseq
    %v27 = vshrl.u32 %v26, 7
    %v28 = vsub.s32 0, %v27
    %v29 = vrot.slane %v24, %v28
    %vm31 = vcmask 490496
    %v33 = vsel %vm31, %v15, 0
    %vm35 = vcmask 1043456
    %v37 = vsel %vm35, %v23, 0
    %39 = vmatprep.subr.mxu0 0.0
    %40 = vmatpush1.msra.mxu0 %v16
    %41 = vmatprep.subr.mxu0 0.0
    %42 = vmatpush1.msra.mxu0 %v17
    %43 = vmatprep.subr.mxu0 0.0
    %44 = vmatpush1.msra.mxu0 %v18
    %45 = vmatprep.subr.mxu0 0.0
    %46 = vmatpush1.msra.mxu0 %v19
    %47 = vmatprep.subr.mxu0 0.0
    %48 = vmatpush1.msra.mxu0 %v20
    %49 = vmatprep.subr.mxu0 0.0
    %50 = vmatpush1.msra.mxu0 %v21
    %51 = vmatprep.subr.mxu0 0.0
    %52 = vmatpush1.msra.mxu0 %v22
    %53 = vmatprep.subr.mxu0 0.0
    %54 = vmatpush1.msra.mxu0 %v37
    %55 = vmatprep.subr.mxu0 0.0
    %56 = vmatpush1.msra.mxu0 0.0
    %57 = vmatprep.subr.mxu0 0.0
    %58 = vmatpush1.msra.mxu0 0.0
    %59 = vmatprep.subr.mxu0 0.0
    %60 = vmatpush1.msra.mxu0 0.0
    %61 = vmatprep.subr.mxu0 0.0
    %62 = vmatpush1.msra.mxu0 0.0
    %63 = vmatprep.subr.mxu0 0.0
    %64 = vmatpush1.msra.mxu0 0.0
    %65 = vmatprep.subr.mxu0 0.0
    %66 = vmatpush1.msra.mxu0 0.0
    %67 = vmatprep.subr.mxu0 0.0
    %68 = vmatpush1.msra.mxu0 0.0
    %69 = vmatprep.subr.mxu0 0.0
    %70 = vmatpush1.msra.mxu0 0.0
    %71 = vmatprep.subr.mxu0 0.0
    %72 = vmatpush1.msra.mxu0 0.0
    %73 = vmatprep.subr.mxu0 0.0
    %74 = vmatpush1.msra.mxu0 0.0
    %75 = vmatprep.subr.mxu0 0.0
    %76 = vmatpush1.msra.mxu0 0.0
    %77 = vmatprep.subr.mxu0 0.0
    %78 = vmatpush1.msra.mxu0 0.0
    %79 = vmatprep.subr.mxu0 0.0
    %80 = vmatpush1.msra.mxu0 0.0
    %81 = vmatprep.subr.mxu0 0.0
    %82 = vmatpush1.msra.mxu0 0.0
    %83 = vmatprep.subr.mxu0 0.0
    %84 = vmatpush1.msra.mxu0 0.0
    %85 = vmatprep.subr.mxu0 0.0
    %86 = vmatpush1.msra.mxu0 0.0
    %87 = vmatprep.subr.mxu0 0.0
    %88 = vmatpush1.msra.mxu0 0.0
    %89 = vmatprep.subr.mxu0 0.0
    %90 = vmatpush1.msra.mxu0 0.0
    %91 = vmatprep.subr.mxu0 0.0
    %92 = vmatpush1.msra.mxu0 0.0
    %93 = vmatprep.subr.mxu0 0.0
    %94 = vmatpush1.msra.mxu0 0.0
    %95 = vmatprep.subr.mxu0 0.0
    %96 = vmatpush1.msra.mxu0 0.0
    %97 = vmatprep.subr.mxu0 0.0
    %98 = vmatpush1.msra.mxu0 0.0
    %99 = vmatprep.subr.mxu0 0.0
    %100 = vmatpush1.msra.mxu0 0.0
    %101 = vmatprep.subr.mxu0 0.0
    %102 = vmatpush1.msra.mxu0 0.0
    %103 = vmatprep.mubr.f32.mxu0 0.0
    %104 = vmatmul.mubr.f32.gmra.mrb[0].mxu0 %v33
    %v105 = vpop.f32.mrb[0].mxu0
    %v106 = vadd.f32 %v29, %v105
    %v107 = vpop.f32.mrb[0].mxu0
    %108 = vdwg.mxu0
    %vm109 = vcmask 31744
    %110 = vst.msk [vmem:[#allocation2] sm:$0xff] %vm109, %v106
    // Predicated region
    $region14: #{tpu_custom_call.1} parent=1 // pred_check
      _
    $region15: #{tpu_custom_call.1} parent=1 // pred_check_branch
      %112 = sbr.rel (0) target = $region17
    $region16: #{tpu_custom_call.1} parent=1 // pred_region
      %s114 = ssub.s32 128, 32
      %115 = vsyncadd [#allocation3], %s114
      %s116 = sshll.u32 [#allocation2], 4
      %s117 = int_to_ptr.vmem [resolvable:$true] %s116
      %122 = dma.vmem_to_hbm [thread:$0]  %s117, 32, %s3, [#allocation3], 32, 32, 2
    $region17: #{tpu_custom_call.1} parent=1 // pred_fallthru
      _
    // Predicated region
    $region18: #{tpu_custom_call.1} parent=1 // pred_check
      _
    $region19: #{tpu_custom_call.1} parent=1 // pred_check_branch
      %124 = sbr.rel (0) target = $region21
    $region20: #{tpu_custom_call.1} parent=1 // pred_region
      %125 = dma.done [#allocation3], 128
    $region21: #{tpu_custom_call.1} parent=1 // pred_fallthru
      _
    %126 = vsyncpa [#allocation3], 1

</llo_original>
